<compile_context>
chip_gen: v6e
topology: v6e:2x2x1
jax: 0.10.0
libtpu: 0.0.40
codegen_flags: <defaults>
</compile_context>

<pallas_src>
import math

import jax
import jax.numpy as jnp
import numpy as np
from jax.experimental import pallas as pl
from jax.experimental.pallas import tpu as pltpu

B, S, D = 2, 8, 32          # batch, seq_len, d_model
H = 4                       # heads
DK = D // H                 # d_k
BS = B * S
EPS = 1e-6
NEG_MASK = -1e9             # masked_fill value used by the reference module
NEG_CROSS = -2e9            # strictly below any masked within-batch score (kills cross-batch cols)


def sublayer_connection_kernel(x_ref, sel_ref, wqkv_ref, bias_ref, wot_ref, o_ref):
    x = x_ref[...]                       # (BS, D) f32

    # ---- LayerNorm statistics only; the affine (a2, b2) is folded into wqkv/bqkv in the wrapper.
    #      PyTorch semantics of the module: unbiased std, (x - mean) / (std + eps).
    mean = jnp.mean(x, axis=-1, keepdims=True)
    xc = x - mean
    var = jnp.sum(xc * xc, axis=-1, keepdims=True) * (1.0 / (D - 1))
    inv_std = pl.reciprocal(jnp.sqrt(var) + EPS, approx=False)   # (BS,1), exact
    y = xc * inv_std

    # ---- fused Q/K/V projection: one (BS,D)@(D,3D) MXU matmul (weights pre-transposed + LN-folded)
    bias = bias_ref[...]                 # (1, 4D) packed [bqkv | bo]
    bqkv = bias[:, :3 * D]               # (1, 3D)
    bo = bias[:, 3 * D:]                 # (1, D)
    qkv = jnp.dot(y, wqkv_ref[...], preferred_element_type=jnp.float32) + bqkv

    # ---- exact masked_fill selection:
    #      sel = 1.0 (keep, same batch & mask!=0), 0.0 (masked, same batch), -1.0 (cross-batch)
    sel = sel_ref[...]                   # (BS, BS)
    keep = sel > 0.5
    fill = jnp.where(sel < -0.5, jnp.float32(NEG_CROSS), jnp.float32(NEG_MASK))

    inv_sqrt_dk = jnp.float32(1.0 / math.sqrt(DK))

    ctx_heads = []
    for h in range(H):                   # static unroll (H=4); no loop-carried MXU dependence
        lo = h * DK
        qh = qkv[:, lo:lo + DK]                  # (BS, DK)
        kh = qkv[:, D + lo:D + lo + DK]          # (BS, DK)
        vh = qkv[:, 2 * D + lo:2 * D + lo + DK]  # (BS, DK)

        # scores for BOTH batches at once; cross-batch entries are forced to NEG_CROSS by `fill`
        s = jax.lax.dot_general(qh, kh, (((1,), (1,)), ((), ())),
                                preferred_element_type=jnp.float32)   # (BS, BS), q @ k.T
        s = jnp.where(keep, s * inv_sqrt_dk, fill)                    # exact masked_fill semantics

        m = jnp.max(s, axis=-1, keepdims=True)
        e = jnp.exp(s - m)
        p = e * pl.reciprocal(jnp.sum(e, axis=-1, keepdims=True), approx=False)

        ctx_heads.append(jnp.dot(p, vh, preferred_element_type=jnp.float32))  # (BS, DK)

    # lane-concat the heads, then ONE (BS,D)@(D,D) output-projection matmul
    ctx = jnp.concatenate(ctx_heads, axis=1)                          # (BS, D)
    out = x + bo + jnp.dot(ctx, wot_ref[...], preferred_element_type=jnp.float32)
    o_ref[...] = out.astype(o_ref.dtype)


def prepare_weights(a2, b2, wq, bq, wk, bk, wv, bv, wo, bo):
    """Per-layer, call-once weight fusion (hoisted out of the forward hot path)."""
    w_un = jnp.concatenate([wq.T, wk.T, wv.T], axis=1)          # (D, 3D), torch Linear: y @ W.T + b
    # fold LayerNorm affine: (a2*n + b2) @ W.T + b == n @ (a2.T * W.T) + (b2 @ W.T + b)
    wqkv_t = a2.reshape(D, 1) * w_un                            # (D, 3D)
    bqkv = jnp.concatenate([bq, bk, bv], axis=1) + b2 @ w_un    # (1, 3D)
    bias_all = jnp.concatenate([bqkv, bo], axis=1)              # (1, 4D) = (1,128) lane-dense
    return wqkv_t, bias_all, wo.T


def prepare_mask(mask):
    """Call-once (per distinct mask) block-mask selector: 1=keep, 0=masked within batch, -1=cross-batch."""
    keep = (mask != 0).astype(jnp.float32)                                      # (B,S,S)
    same_b = (jnp.arange(B)[:, None, None, None] ==
              jnp.arange(B)[None, None, :, None])                               # (B,1,B,1)
    sel = jnp.where(same_b, keep[:, :, None, :], jnp.float32(-1.0))             # (B,S,B,S)
    return sel.reshape(BS, BS)


@jax.jit
def sublayer_connection(x, sel, wqkv_t, bias_all, wo_t):
    x2d = x.reshape(BS, D)
    vmem = pl.BlockSpec(memory_space=pltpu.MemorySpace.VMEM)    # whole array, VMEM, no grid
    out2d = pl.pallas_call(
        sublayer_connection_kernel,
        out_shape=jax.ShapeDtypeStruct((BS, D), jnp.float32),
        in_specs=[vmem] * 5,
        out_specs=vmem,
    )(x2d, sel, wqkv_t, bias_all, wo_t)
    return out2d.reshape(B, S, D)


def reference(x, mask, a2, b2, wq, bq, wk, bk, wv, bv, wo, bo):
    mean = x.mean(-1, keepdims=True)
    xc = x - mean
    std = jnp.sqrt((xc ** 2).sum(-1, keepdims=True) / (D - 1))
    y = a2 * xc / (std + EPS) + b2
    lin = lambda t, w, b: t @ w.T + b
    q, k, v = lin(y, wq, bq), lin(y, wk, bk), lin(y, wv, bv)
    qh = q.reshape(B, S, H, DK).transpose(0, 2, 1, 3)
    kh = k.reshape(B, S, H, DK).transpose(0, 2, 1, 3)
    vh = v.reshape(B, S, H, DK).transpose(0, 2, 1, 3)
    scores = jnp.einsum('bhqd,bhkd->bhqk', qh, kh) / jnp.sqrt(float(DK))
    scores = jnp.where(mask[:, None] == 0, NEG_MASK, scores)
    p = jax.nn.softmax(scores, axis=-1)
    ctx = jnp.einsum('bhqk,bhkd->bhqd', p, vh).transpose(0, 2, 1, 3).reshape(B, S, D)
    return x + lin(ctx, wo, bo)


if __name__ == "__main__":
    key = jax.random.PRNGKey(0)
    ks = jax.random.split(key, 11)
    x = jax.random.normal(ks[0], (B, S, D), dtype=jnp.float32)

    # LayerNorm params (ones / zeros, as in __init__)
    a2 = jnp.ones((1, D), dtype=jnp.float32)
    b2 = jnp.zeros((1, D), dtype=jnp.float32)

    # Four Linear(D, D) layers of MultiHeadAttention, deterministic synthetic init
    scale = 1.0 / np.sqrt(D)
    wq = jax.random.uniform(ks[1], (D, D), jnp.float32, -scale, scale)
    bq = jax.random.uniform(ks[2], (1, D), jnp.float32, -scale, scale)
    wk = jax.random.uniform(ks[3], (D, D), jnp.float32, -scale, scale)
    bk = jax.random.uniform(ks[4], (1, D), jnp.float32, -scale, scale)
    wv = jax.random.uniform(ks[5], (D, D), jnp.float32, -scale, scale)
    bv = jax.random.uniform(ks[6], (1, D), jnp.float32, -scale, scale)
    wo = jax.random.uniform(ks[7], (D, D), jnp.float32, -scale, scale)
    bo = jax.random.uniform(ks[8], (1, D), jnp.float32, -scale, scale)

    # one-time weight fusion (hoisted out of the per-call path)
    prepped = prepare_weights(a2, b2, wq, bq, wk, bk, wv, bv, wo, bo)
    prepped = jax.tree_util.tree_map(jax.block_until_ready, prepped)

    # 1) mask = zeros, as in the module spec (Variable(torch.zeros(...))) -> fully-masked rows
    mask0 = jnp.zeros((B, S, S), dtype=jnp.float32)
    sel0 = jax.block_until_ready(prepare_mask(mask0))
    out0 = jax.block_until_ready(sublayer_connection(x, sel0, *prepped))
    ref0 = reference(x, mask0, a2, b2, wq, bq, wk, bk, wv, bv, wo, bo)
    assert out0.shape == (B, S, D)
    np.testing.assert_allclose(np.asarray(out0), np.asarray(ref0), rtol=1e-3, atol=1e-3)

    # 2) a non-trivial 0/1 mask to exercise the non-degenerate softmax path
    mask1 = (jax.random.uniform(ks[9], (B, S, S)) > 0.3).astype(jnp.float32)
    sel1 = jax.block_until_ready(prepare_mask(mask1))
    out1 = jax.block_until_ready(sublayer_connection(x, sel1, *prepped))
    ref1 = reference(x, mask1, a2, b2, wq, bq, wk, bk, wv, bv, wo, bo)
    np.testing.assert_allclose(np.asarray(out1), np.asarray(ref1), rtol=1e-3, atol=1e-3)

    # TODO(synk): nn.Dropout (p=0.1) is treated as identity (eval mode); training-mode RNG dropout
    # would need pltpu.prng_seed / prng_random_bits and is intentionally not implemented here.
    print("KERNEL_OK")
</pallas_src>

<mosaic_0001>
module attributes {stable_mosaic.version = 11 : i64} {
  func.func @sublayer_connection_kernel(%arg0: memref<16x32xf32, #tpu.memory_space<vmem>>, %arg1: memref<16x16xf32, #tpu.memory_space<vmem>>, %arg2: memref<32x96xf32, #tpu.memory_space<vmem>>, %arg3: memref<1x128xf32, #tpu.memory_space<vmem>>, %arg4: memref<32x32xf32, #tpu.memory_space<vmem>>, %arg5: memref<16x32xf32, #tpu.memory_space<vmem>>) attributes {dimension_semantics = [], scalar_prefetch = 0 : i64, scratch_operands = 0 : i64, tpu.core_type = #tpu.core_type<tc>} {
    %c0 = arith.constant 0 : index
    %c0_0 = arith.constant 0 : index
    %0 = vector.load %arg0[%c0, %c0_0] : memref<16x32xf32, #tpu.memory_space<vmem>>, vector<16x32xf32>
    %cst = arith.constant dense<0.000000e+00> : vector<16xf32>
    %1 = vector.multi_reduction <add>, %0, %cst [1] : vector<16x32xf32> to vector<16xf32>
    %2 = vector.shape_cast %1 : vector<16xf32> to vector<16x1xf32>
    %cst_1 = arith.constant 3.200000e+01 : f32
    %3 = vector.broadcast %cst_1 : f32 to vector<16x1xf32>
    %4 = arith.divf %2, %3 : vector<16x1xf32>
    %5 = vector.broadcast %4 : vector<16x1xf32> to vector<16x32xf32>
    %6 = arith.subf %0, %5 : vector<16x32xf32>
    %7 = arith.mulf %6, %6 : vector<16x32xf32>
    %cst_2 = arith.constant dense<0.000000e+00> : vector<16xf32>
    %8 = vector.multi_reduction <add>, %7, %cst_2 [1] : vector<16x32xf32> to vector<16xf32>
    %9 = vector.shape_cast %8 : vector<16xf32> to vector<16x1xf32>
    %cst_3 = arith.constant 0.0322580636 : f32
    %10 = vector.broadcast %cst_3 : f32 to vector<16x1xf32>
    %11 = arith.mulf %9, %10 : vector<16x1xf32>
    %12 = math.sqrt %11 : vector<16x1xf32>
    %cst_4 = arith.constant 9.99999997E-7 : f32
    %13 = vector.broadcast %cst_4 : f32 to vector<16x1xf32>
    %14 = arith.addf %12, %13 : vector<16x1xf32>
    %15 = tpu.reciprocal %14 : vector<16x1xf32> -> vector<16x1xf32>
    %16 = vector.broadcast %15 : vector<16x1xf32> to vector<16x32xf32>
    %17 = arith.mulf %6, %16 : vector<16x32xf32>
    %c0_5 = arith.constant 0 : index
    %c0_6 = arith.constant 0 : index
    %18 = vector.load %arg3[%c0_5, %c0_6] : memref<1x128xf32, #tpu.memory_space<vmem>>, vector<1x128xf32>
    %19 = vector.extract_strided_slice %18 {offsets = [0, 0], sizes = [1, 96], strides = [1, 1]} : vector<1x128xf32> to vector<1x96xf32>
    %20 = vector.extract_strided_slice %18 {offsets = [0, 96], sizes = [1, 32], strides = [1, 1]} : vector<1x128xf32> to vector<1x32xf32>
    %c0_7 = arith.constant 0 : index
    %c0_8 = arith.constant 0 : index
    %21 = vector.load %arg2[%c0_7, %c0_8] : memref<32x96xf32, #tpu.memory_space<vmem>>, vector<32x96xf32>
    %cst_9 = arith.constant dense<0.000000e+00> : vector<16x96xf32>
    %22 = tpu.matmul %17, %21, %cst_9 {dimension_numbers = #tpu.dot_dimension_numbers<[1], [0], [0], [1], [0, 0, 1, 1], [], []>} : vector<16x32xf32>, vector<32x96xf32>, vector<16x96xf32> -> vector<16x96xf32>
    %23 = vector.broadcast %19 : vector<1x96xf32> to vector<16x96xf32>
    %24 = arith.addf %22, %23 : vector<16x96xf32>
    %c0_10 = arith.constant 0 : index
    %c0_11 = arith.constant 0 : index
    %25 = vector.load %arg1[%c0_10, %c0_11] : memref<16x16xf32, #tpu.memory_space<vmem>>, vector<16x16xf32>
    %cst_12 = arith.constant 5.000000e-01 : f32
    %26 = vector.broadcast %cst_12 : f32 to vector<16x16xf32>
    %27 = arith.cmpf ogt, %25, %26 : vector<16x16xf32>
    %cst_13 = arith.constant -5.000000e-01 : f32
    %28 = vector.broadcast %cst_13 : f32 to vector<16x16xf32>
    %29 = arith.cmpf olt, %25, %28 : vector<16x16xf32>
    %cst_14 = arith.constant -2.000000e+09 : f32
    %cst_15 = arith.constant -1.000000e+09 : f32
    %30 = vector.broadcast %cst_14 : f32 to vector<16x16xf32>
    %31 = vector.broadcast %cst_15 : f32 to vector<16x16xf32>
    %32 = arith.select %29, %30, %31 : vector<16x16xi1>, vector<16x16xf32>
    %33 = vector.extract_strided_slice %24 {offsets = [0, 0], sizes = [16, 8], strides = [1, 1]} : vector<16x96xf32> to vector<16x8xf32>
    %34 = vector.extract_strided_slice %24 {offsets = [0, 32], sizes = [16, 8], strides = [1, 1]} : vector<16x96xf32> to vector<16x8xf32>
    %35 = vector.extract_strided_slice %24 {offsets = [0, 64], sizes = [16, 8], strides = [1, 1]} : vector<16x96xf32> to vector<16x8xf32>
    %cst_16 = arith.constant dense<0.000000e+00> : vector<16x16xf32>
    %36 = tpu.matmul %33, %34, %cst_16 {dimension_numbers = #tpu.dot_dimension_numbers<[1], [1], [0], [0], [0, 0, 1, 0], [], []>} : vector<16x8xf32>, vector<16x8xf32>, vector<16x16xf32> -> vector<16x16xf32>
    %cst_17 = arith.constant 0.353553385 : f32
    %37 = vector.broadcast %cst_17 : f32 to vector<16x16xf32>
    %38 = arith.mulf %36, %37 : vector<16x16xf32>
    %39 = arith.select %27, %38, %32 : vector<16x16xi1>, vector<16x16xf32>
    %cst_18 = arith.constant dense<0xFF800000> : vector<16xf32>
    %40 = vector.multi_reduction <maximumf>, %39, %cst_18 [1] : vector<16x16xf32> to vector<16xf32>
    %41 = vector.shape_cast %40 : vector<16xf32> to vector<16x1xf32>
    %42 = vector.broadcast %41 : vector<16x1xf32> to vector<16x16xf32>
    %43 = arith.subf %39, %42 : vector<16x16xf32>
    %44 = math.exp %43 : vector<16x16xf32>
    %cst_19 = arith.constant dense<0.000000e+00> : vector<16xf32>
    %45 = vector.multi_reduction <add>, %44, %cst_19 [1] : vector<16x16xf32> to vector<16xf32>
    %46 = vector.shape_cast %45 : vector<16xf32> to vector<16x1xf32>
    %47 = tpu.reciprocal %46 : vector<16x1xf32> -> vector<16x1xf32>
    %48 = vector.broadcast %47 : vector<16x1xf32> to vector<16x16xf32>
    %49 = arith.mulf %44, %48 : vector<16x16xf32>
    %cst_20 = arith.constant dense<0.000000e+00> : vector<16x8xf32>
    %50 = tpu.matmul %49, %35, %cst_20 {dimension_numbers = #tpu.dot_dimension_numbers<[1], [0], [0], [1], [0, 0, 1, 1], [], []>} : vector<16x16xf32>, vector<16x8xf32>, vector<16x8xf32> -> vector<16x8xf32>
    %51 = vector.extract_strided_slice %24 {offsets = [0, 8], sizes = [16, 8], strides = [1, 1]} : vector<16x96xf32> to vector<16x8xf32>
    %52 = vector.extract_strided_slice %24 {offsets = [0, 40], sizes = [16, 8], strides = [1, 1]} : vector<16x96xf32> to vector<16x8xf32>
    %53 = vector.extract_strided_slice %24 {offsets = [0, 72], sizes = [16, 8], strides = [1, 1]} : vector<16x96xf32> to vector<16x8xf32>
    %cst_21 = arith.constant dense<0.000000e+00> : vector<16x16xf32>
    %54 = tpu.matmul %51, %52, %cst_21 {dimension_numbers = #tpu.dot_dimension_numbers<[1], [1], [0], [0], [0, 0, 1, 0], [], []>} : vector<16x8xf32>, vector<16x8xf32>, vector<16x16xf32> -> vector<16x16xf32>
    %cst_22 = arith.constant 0.353553385 : f32
    %55 = vector.broadcast %cst_22 : f32 to vector<16x16xf32>
    %56 = arith.mulf %54, %55 : vector<16x16xf32>
    %57 = arith.select %27, %56, %32 : vector<16x16xi1>, vector<16x16xf32>
    %cst_23 = arith.constant dense<0xFF800000> : vector<16xf32>
    %58 = vector.multi_reduction <maximumf>, %57, %cst_23 [1] : vector<16x16xf32> to vector<16xf32>
    %59 = vector.shape_cast %58 : vector<16xf32> to vector<16x1xf32>
    %60 = vector.broadcast %59 : vector<16x1xf32> to vector<16x16xf32>
    %61 = arith.subf %57, %60 : vector<16x16xf32>
    %62 = math.exp %61 : vector<16x16xf32>
    %cst_24 = arith.constant dense<0.000000e+00> : vector<16xf32>
    %63 = vector.multi_reduction <add>, %62, %cst_24 [1] : vector<16x16xf32> to vector<16xf32>
    %64 = vector.shape_cast %63 : vector<16xf32> to vector<16x1xf32>
    %65 = tpu.reciprocal %64 : vector<16x1xf32> -> vector<16x1xf32>
    %66 = vector.broadcast %65 : vector<16x1xf32> to vector<16x16xf32>
    %67 = arith.mulf %62, %66 : vector<16x16xf32>
    %cst_25 = arith.constant dense<0.000000e+00> : vector<16x8xf32>
    %68 = tpu.matmul %67, %53, %cst_25 {dimension_numbers = #tpu.dot_dimension_numbers<[1], [0], [0], [1], [0, 0, 1, 1], [], []>} : vector<16x16xf32>, vector<16x8xf32>, vector<16x8xf32> -> vector<16x8xf32>
    %69 = vector.extract_strided_slice %24 {offsets = [0, 16], sizes = [16, 8], strides = [1, 1]} : vector<16x96xf32> to vector<16x8xf32>
    %70 = vector.extract_strided_slice %24 {offsets = [0, 48], sizes = [16, 8], strides = [1, 1]} : vector<16x96xf32> to vector<16x8xf32>
    %71 = vector.extract_strided_slice %24 {offsets = [0, 80], sizes = [16, 8], strides = [1, 1]} : vector<16x96xf32> to vector<16x8xf32>
    %cst_26 = arith.constant dense<0.000000e+00> : vector<16x16xf32>
    %72 = tpu.matmul %69, %70, %cst_26 {dimension_numbers = #tpu.dot_dimension_numbers<[1], [1], [0], [0], [0, 0, 1, 0], [], []>} : vector<16x8xf32>, vector<16x8xf32>, vector<16x16xf32> -> vector<16x16xf32>
    %cst_27 = arith.constant 0.353553385 : f32
    %73 = vector.broadcast %cst_27 : f32 to vector<16x16xf32>
    %74 = arith.mulf %72, %73 : vector<16x16xf32>
    %75 = arith.select %27, %74, %32 : vector<16x16xi1>, vector<16x16xf32>
    %cst_28 = arith.constant dense<0xFF800000> : vector<16xf32>
    %76 = vector.multi_reduction <maximumf>, %75, %cst_28 [1] : vector<16x16xf32> to vector<16xf32>
    %77 = vector.shape_cast %76 : vector<16xf32> to vector<16x1xf32>
    %78 = vector.broadcast %77 : vector<16x1xf32> to vector<16x16xf32>
    %79 = arith.subf %75, %78 : vector<16x16xf32>
    %80 = math.exp %79 : vector<16x16xf32>
    %cst_29 = arith.constant dense<0.000000e+00> : vector<16xf32>
    %81 = vector.multi_reduction <add>, %80, %cst_29 [1] : vector<16x16xf32> to vector<16xf32>
    %82 = vector.shape_cast %81 : vector<16xf32> to vector<16x1xf32>
    %83 = tpu.reciprocal %82 : vector<16x1xf32> -> vector<16x1xf32>
    %84 = vector.broadcast %83 : vector<16x1xf32> to vector<16x16xf32>
    %85 = arith.mulf %80, %84 : vector<16x16xf32>
    %cst_30 = arith.constant dense<0.000000e+00> : vector<16x8xf32>
    %86 = tpu.matmul %85, %71, %cst_30 {dimension_numbers = #tpu.dot_dimension_numbers<[1], [0], [0], [1], [0, 0, 1, 1], [], []>} : vector<16x16xf32>, vector<16x8xf32>, vector<16x8xf32> -> vector<16x8xf32>
    %87 = vector.extract_strided_slice %24 {offsets = [0, 24], sizes = [16, 8], strides = [1, 1]} : vector<16x96xf32> to vector<16x8xf32>
    %88 = vector.extract_strided_slice %24 {offsets = [0, 56], sizes = [16, 8], strides = [1, 1]} : vector<16x96xf32> to vector<16x8xf32>
    %89 = vector.extract_strided_slice %24 {offsets = [0, 88], sizes = [16, 8], strides = [1, 1]} : vector<16x96xf32> to vector<16x8xf32>
    %cst_31 = arith.constant dense<0.000000e+00> : vector<16x16xf32>
    %90 = tpu.matmul %87, %88, %cst_31 {dimension_numbers = #tpu.dot_dimension_numbers<[1], [1], [0], [0], [0, 0, 1, 0], [], []>} : vector<16x8xf32>, vector<16x8xf32>, vector<16x16xf32> -> vector<16x16xf32>
    %cst_32 = arith.constant 0.353553385 : f32
    %91 = vector.broadcast %cst_32 : f32 to vector<16x16xf32>
    %92 = arith.mulf %90, %91 : vector<16x16xf32>
    %93 = arith.select %27, %92, %32 : vector<16x16xi1>, vector<16x16xf32>
    %cst_33 = arith.constant dense<0xFF800000> : vector<16xf32>
    %94 = vector.multi_reduction <maximumf>, %93, %cst_33 [1] : vector<16x16xf32> to vector<16xf32>
    %95 = vector.shape_cast %94 : vector<16xf32> to vector<16x1xf32>
    %96 = vector.broadcast %95 : vector<16x1xf32> to vector<16x16xf32>
    %97 = arith.subf %93, %96 : vector<16x16xf32>
    %98 = math.exp %97 : vector<16x16xf32>
    %cst_34 = arith.constant dense<0.000000e+00> : vector<16xf32>
    %99 = vector.multi_reduction <add>, %98, %cst_34 [1] : vector<16x16xf32> to vector<16xf32>
    %100 = vector.shape_cast %99 : vector<16xf32> to vector<16x1xf32>
    %101 = tpu.reciprocal %100 : vector<16x1xf32> -> vector<16x1xf32>
    %102 = vector.broadcast %101 : vector<16x1xf32> to vector<16x16xf32>
    %103 = arith.mulf %98, %102 : vector<16x16xf32>
    %cst_35 = arith.constant dense<0.000000e+00> : vector<16x8xf32>
    %104 = tpu.matmul %103, %89, %cst_35 {dimension_numbers = #tpu.dot_dimension_numbers<[1], [0], [0], [1], [0, 0, 1, 1], [], []>} : vector<16x16xf32>, vector<16x8xf32>, vector<16x8xf32> -> vector<16x8xf32>
    %105 = tpu.concatenate %50, %68, %86, %104 in 1 : vector<16x8xf32>, vector<16x8xf32>, vector<16x8xf32>, vector<16x8xf32> -> vector<16x32xf32>
    %106 = vector.broadcast %20 : vector<1x32xf32> to vector<16x32xf32>
    %107 = arith.addf %0, %106 : vector<16x32xf32>
    %c0_36 = arith.constant 0 : index
    %c0_37 = arith.constant 0 : index
    %108 = vector.load %arg4[%c0_36, %c0_37] : memref<32x32xf32, #tpu.memory_space<vmem>>, vector<32x32xf32>
    %cst_38 = arith.constant dense<0.000000e+00> : vector<16x32xf32>
    %109 = tpu.matmul %105, %108, %cst_38 {dimension_numbers = #tpu.dot_dimension_numbers<[1], [0], [0], [1], [0, 0, 1, 1], [], []>} : vector<16x32xf32>, vector<32x32xf32>, vector<16x32xf32> -> vector<16x32xf32>
    %110 = arith.addf %107, %109 : vector<16x32xf32>
    %c0_39 = arith.constant 0 : index
    %c0_40 = arith.constant 0 : index
    %111 = vector.load %arg5[%c0_39, %c0_40] : memref<16x32xf32, #tpu.memory_space<vmem>>, vector<16x32xf32>
    tpu.vector_store %arg5[%c0_39, %c0_40], %110 {strides = array<i32>} : memref<16x32xf32, #tpu.memory_space<vmem>>, vector<16x32xf32>,
    return
  }
}

</mosaic_0001>

<llo_original>
// kernel: sublayer_connection.1
$region0: #{sublayer_connection.1}
  #allocation0 [shape = 'u32[]', space=smem, size = 0x4, offset = 0x4, fixed_abs, tag = 'smem constant byte address 0x4 - core index']
  #allocation1 [shape = 'u32[144,128]{1,0:T(1,128)}', space=vmem, size = 0x12000, scoped, tag = 'internal scratch']
  %s0 = inlined_call_operand.hbm [shape: f32[16,32], index: 0, kind: input, shape index: {}]
  %s1 = inlined_call_operand.hbm [shape: f32[16,16], index: 1, kind: input, shape index: {}]
  %s2 = inlined_call_operand.hbm [shape: f32[32,96], index: 2, kind: input, shape index: {}]
  %s3 = inlined_call_operand.vmem [shape: f32[1,128], index: 3, kind: input, shape index: {}]
  %s4 = inlined_call_operand.hbm [shape: f32[32,32], index: 4, kind: input, shape index: {}]
  %s5 = inlined_call_operand.hbm [shape: f32[16,32], index: 5, kind: output, shape index: {}]
  %s6 = sld [smem:[#allocation0]]
  $region46: #{sublayer_connection.1} parent=0
    _
  %s8 = ssub.s32 1, %s6
  %s9 = scalar_select 0, %s8, %s6
  $region1: #{sublayer_connection.1} parent=0
    #allocation2 [shape = 'u8[8192]{0}', space=vmem, size = 0x2000, scoped, tag = 'input window, operand 0, single buffered']
    #allocation3 [shape = 's32[1]{0}', space=sflag, size = 0x4, scoped, tag = 'scoped memory for sublayer_connection.1']
    #allocation4 [shape = 's32[1]{0}', space=sflag, size = 0x4, scoped, tag = 'scoped memory for sublayer_connection.1']
    #allocation5 [shape = 'u8[8192]{0}', space=vmem, size = 0x2000, scoped, tag = 'input window, operand 1, single buffered']
    #allocation6 [shape = 's32[1]{0}', space=sflag, size = 0x4, scoped, tag = 'scoped memory for sublayer_connection.1']
    #allocation7 [shape = 'u8[16384]{0}', space=vmem, size = 0x4000, scoped, tag = 'input window, operand 2, single buffered']
    #allocation8 [shape = 'u8[16384]{0}', space=vmem, size = 0x4000, scoped, tag = 'input window, operand 4, single buffered']
    #allocation9 [shape = 's32[1]{0}', space=sflag, size = 0x4, scoped, tag = 'scoped memory for sublayer_connection.1']
    #allocation10 [shape = 'u8[8192]{0}', space=vmem, size = 0x2000, scoped, tag = 'output window, operand 0, single buffered']
    %10 = vsyncpa [#allocation3], 0
    %11 = vsyncpa [#allocation6], 0
    %12 = vsyncpa [#allocation9], 0
    %13 = vsyncpa [#allocation4], 0
    // Predicated region
    $region2: #{sublayer_connection.1} parent=1 // pred_check
      _
    $region3: #{sublayer_connection.1} parent=1 // pred_check_branch
      %15 = sbr.rel (0) target = $region5
    $region4: #{sublayer_connection.1} parent=1 // pred_region
      %s17 = ssub.s32 256, 256
      %18 = vsyncadd [#allocation3], %s17
      %s19 = sshll.u32 [#allocation2], 4
      %s20 = int_to_ptr.vmem [resolvable:$true] %s19
      %25 = dma.hbm_to_vmem [thread:$0]  %s0, 256, %s20, [#allocation3], 128, 128, 8
    $region5: #{sublayer_connection.1} parent=1 // pred_fallthru
      _
    // Predicated region
    $region6: #{sublayer_connection.1} parent=1 // pred_check
      _
    $region7: #{sublayer_connection.1} parent=1 // pred_check_branch
      %27 = sbr.rel (0) target = $region9
    $region8: #{sublayer_connection.1} parent=1 // pred_region
      %s29 = ssub.s32 256, 256
      %30 = vsyncadd [#allocation6], %s29
      %s31 = sshll.u32 [#allocation5], 4
      %s32 = int_to_ptr.vmem [resolvable:$true] %s31
      %37 = dma.hbm_to_vmem [thread:$0]  %s1, 256, %s32, [#allocation6], 128, 128, 8
    $region9: #{sublayer_connection.1} parent=1 // pred_fallthru
      _
    // Predicated region
    $region10: #{sublayer_connection.1} parent=1 // pred_check
      _
    $region11: #{sublayer_connection.1} parent=1 // pred_check_branch
      %39 = sbr.rel (0) target = $region13
    $region12: #{sublayer_connection.1} parent=1 // pred_region
      %s41 = ssub.s32 512, 512
      %42 = vsyncadd [#allocation6], %s41
      %s43 = sshll.u32 [#allocation7], 4
      %s44 = int_to_ptr.vmem [resolvable:$true] %s43
      %49 = dma.hbm_to_vmem [thread:$0]  %s2, 512, %s44, [#allocation6], 128, 128, 8
    $region13: #{sublayer_connection.1} parent=1 // pred_fallthru
      _
    // Predicated region
    $region14: #{sublayer_connection.1} parent=1 // pred_check
      _
    $region15: #{sublayer_connection.1} parent=1 // pred_check_branch
      %51 = sbr.rel (0) target = $region17
    $region16: #{sublayer_connection.1} parent=1 // pred_region
      _
    $region17: #{sublayer_connection.1} parent=1 // pred_fallthru
      _
    // Predicated region
    $region18: #{sublayer_connection.1} parent=1 // pred_check
      _
    $region19: #{sublayer_connection.1} parent=1 // pred_check_branch
      %53 = sbr.rel (0) target = $region21
    $region20: #{sublayer_connection.1} parent=1 // pred_region
      %s55 = ssub.s32 512, 512
      %56 = vsyncadd [#allocation9], %s55
      %s57 = sshll.u32 [#allocation8], 4
      %s58 = int_to_ptr.vmem [resolvable:$true] %s57
      %63 = dma.hbm_to_vmem [thread:$0]  %s4, 512, %s58, [#allocation9], 128, 128, 8
    $region21: #{sublayer_connection.1} parent=1 // pred_fallthru
      _
    // Predicated region
    $region22: #{sublayer_connection.1} parent=1 // pred_check
      _
    $region23: #{sublayer_connection.1} parent=1 // pred_check_branch
      %65 = sbr.rel (0) target = $region25
    $region24: #{sublayer_connection.1} parent=1 // pred_region
      %66 = dma.done [#allocation3], 256
    $region25: #{sublayer_connection.1} parent=1 // pred_fallthru
      _
    // Predicated region
    $region26: #{sublayer_connection.1} parent=1 // pred_check
      _
    $region27: #{sublayer_connection.1} parent=1 // pred_check_branch
      %68 = sbr.rel (0) target = $region29
    $region28: #{sublayer_connection.1} parent=1 // pred_region
      %69 = dma.done [#allocation6], 256
    $region29: #{sublayer_connection.1} parent=1 // pred_fallthru
      _
    // Predicated region
    $region30: #{sublayer_connection.1} parent=1 // pred_check
      _
    $region31: #{sublayer_connection.1} parent=1 // pred_check_branch
      %71 = sbr.rel (0) target = $region33
    $region32: #{sublayer_connection.1} parent=1 // pred_region
      %72 = dma.done [#allocation6], 512
    $region33: #{sublayer_connection.1} parent=1 // pred_fallthru
      _
    // Predicated region
    $region34: #{sublayer_connection.1} parent=1 // pred_check
      _
    $region35: #{sublayer_connection.1} parent=1 // pred_check_branch
      %74 = sbr.rel (0) target = $region37
    $region36: #{sublayer_connection.1} parent=1 // pred_region
      %75 = dma.done [#allocation9], 512
    $region37: #{sublayer_connection.1} parent=1 // pred_fallthru
      _
    %v76 = vld [vmem:[#allocation2] sm:$0xff]
    %v77 = vld [vmem:[#allocation2 + $0x8] sm:$0xff]
    %vm78 = vcmask 261120
    %v79 = vsel %vm78, %v76, 0.0
    %80 = vadd.xlane.f32.xlu0 %v79
    %v81 = vpop.xlane.xlu0 %80
    %v82 = vsel %vm78, %v77, 0.0
    %83 = vadd.xlane.f32.xlu0 %v82
    %v84 = vpop.xlane.xlu0 %83
    %v85 = vrcp.pop 32.0
    %v86 = vmul.f32 %v81, %v85
    %v87 = vmul.f32 %v84, %v85
    %v88 = vsub.f32 %v76, %v86
    %v89 = vsub.f32 %v77, %v87
    %v90 = vmul.f32 %v88, %v88
    %v91 = vmul.f32 %v89, %v89
    %v92 = vsel %vm78, %v90, 0.0
    %93 = vadd.xlane.f32.xlu0 %v92
    %v94 = vpop.xlane.xlu0 %93
    %v95 = vsel %vm78, %v91, 0.0
    %96 = vadd.xlane.f32.xlu0 %v95
    %v97 = vpop.xlane.xlu0 %96
    %v98 = vmul.f32 %v94, 0.032258064
    %v99 = vmul.f32 %v97, 0.032258064
    %v100 = vrsqrt.pop %v98
    %v101 = vmul.f32 %v98, %v100
    %vm102 = vcmp.eq.f32.partialorder %v98, inf
    %v103 = vsel %vm102, %v98, %v101
    %vm104 = vcmp.eq.f32.partialorder %v98, 0.0
    %v105 = vand.u32 %v98, 2147483648
    %v106 = vsel %vm104, %v105, %v103
    %v107 = vrsqrt.pop %v99
    %v108 = vmul.f32 %v99, %v107
    %vm109 = vcmp.eq.f32.partialorder %v99, inf
    %v110 = vsel %vm109, %v99, %v108
    %vm111 = vcmp.eq.f32.partialorder %v99, 0.0
    %v112 = vand.u32 %v99, 2147483648
    %v113 = vsel %vm111, %v112, %v110
    %v114 = vadd.f32 %v106, 1e-06
    %v115 = vadd.f32 %v113, 1e-06
    %v116 = vrcp.pop %v114
    %v117 = vrcp.pop %v115
    %v118 = vmul.f32 %v88, %v116
    %v119 = vmul.f32 %v89, %v117
    %v120 = vld [vmem:[%s3] sm:$0x1]
    %v121 = vld [vmem:[#allocation7] sm:$0xff]
    %v122 = vld [vmem:[#allocation7 + $0x8] sm:$0xff]
    %v123 = vld [vmem:[#allocation7 + $0x10] sm:$0xff]
    %v124 = vld [vmem:[#allocation7 + $0x18] sm:$0xff]
    %v126 = vlaneseq
    %v127 = vshrl.u32 %v126, 7
    %v128 = vsub.s32 0, %v127
    %v129 = vrot.slane %v120, %v128
    %v132 = vsel %vm78, %v118, 0
    %v135 = vsel %vm78, %v119, 0
    %137 = vmatprep.subr.mxu0 0.0
    %138 = vmatpush1.msra.mxu0 0.0
    %139 = vmatprep.subr.mxu0 0.0
    %140 = vmatpush1.msra.mxu0 0.0
    %141 = vmatprep.subr.mxu0 0.0
    %142 = vmatpush1.msra.mxu0 0.0
    %143 = vmatprep.subr.mxu0 0.0
    %144 = vmatpush1.msra.mxu0 0.0
    %145 = vmatprep.subr.mxu0 0.0
    %146 = vmatpush1.msra.mxu0 0.0
    %147 = vmatprep.subr.mxu0 0.0
    %148 = vmatpush1.msra.mxu0 0.0
    %149 = vmatprep.subr.mxu0 0.0
    %150 = vmatpush1.msra.mxu0 0.0
    %151 = vmatprep.subr.mxu0 0.0
    %152 = vmatpush1.msra.mxu0 0.0
    %153 = vmatprep.subr.mxu0 0.0
    %154 = vmatpush1.msra.mxu0 0.0
    %155 = vmatprep.subr.mxu0 0.0
    %156 = vmatpush1.msra.mxu0 0.0
    %157 = vmatprep.subr.mxu0 0.0
    %158 = vmatpush1.msra.mxu0 0.0
    %159 = vmatprep.subr.mxu0 0.0
    %160 = vmatpush1.msra.mxu0 0.0
    %161 = vmatprep.subr.mxu0 0.0
    %162 = vmatpush1.msra.mxu0 %v124
    %163 = vmatprep.subr.mxu0 0.0
    %164 = vmatpush1.msra.mxu0 %v123
    %165 = vmatprep.subr.mxu0 0.0
    %166 = vmatpush1.msra.mxu0 %v122
    %167 = vmatprep.subr.mxu0 0.0
    %168 = vmatpush1.msra.mxu0 %v121
    %169 = vmatprep.subr.mxu0 0.0
    %170 = vmatpush2.msra.mxu0 0.0
    %171 = vmatprep.subr.mxu0 0.0
    %172 = vmatpush2.msra.mxu0 0.0
    %173 = vmatprep.subr.mxu0 0.0
    %174 = vmatpush2.msra.mxu0 0.0
    %175 = vmatprep.subr.mxu0 0.0
    %176 = vmatpush2.msra.mxu0 0.0
    %177 = vmatprep.subr.mxu0 0.0
    %178 = vmatpush2.msra.mxu0 0.0
    %179 = vmatprep.subr.mxu0 0.0
    %180 = vmatpush2.msra.mxu0 0.0
    %181 = vmatprep.subr.mxu0 0.0
    %182 = vmatpush2.msra.mxu0 0.0
    %183 = vmatprep.subr.mxu0 0.0
    %184 = vmatpush2.msra.mxu0 0.0
    %185 = vmatprep.subr.mxu0 0.0
    %186 = vmatpush2.msra.mxu0 0.0
    %187 = vmatprep.subr.mxu0 0.0
    %188 = vmatpush2.msra.mxu0 0.0
    %189 = vmatprep.subr.mxu0 0.0
    %190 = vmatpush2.msra.mxu0 0.0
    %191 = vmatprep.subr.mxu0 0.0
    %192 = vmatpush2.msra.mxu0 0.0
    %193 = vmatprep.subr.mxu0 0.0
    %194 = vmatpush2.msra.mxu0 0.0
    %195 = vmatprep.subr.mxu0 0.0
    %196 = vmatpush2.msra.mxu0 0.0
    %197 = vmatprep.subr.mxu0 0.0
    %198 = vmatpush2.msra.mxu0 0.0
    %199 = vmatprep.subr.mxu0 0.0
    %200 = vmatpush2.msra.mxu0 0.0
    %201 = vmatprep.mubr.f32.mxu0 0.0
    %202 = vmatmul.mubr.f32.gmra.mxu0 %v132
    %v203 = vpop.f32.mrf.mxu0
    %v204 = vadd.f32 %v129, %v203
    %v205 = vpop.f32.mrf.mxu0
    %206 = vmatprep.mubr.f32.mxu0 0.0
    %207 = vmatmul.mubr.f32.gmra.mxu0 %v135
    %v208 = vpop.f32.mrf.mxu0
    %v209 = vadd.f32 %v129, %v208
    %v210 = vpop.f32.mrf.mxu0
    %211 = vdwg.mxu0
    %v212 = vld [vmem:[#allocation5] sm:$0xff]
    %v213 = vld [vmem:[#allocation5 + $0x8] sm:$0xff]
    %vm214 = vcmp.gt.f32.partialorder %v212, 0.5
    %vm215 = vcmp.gt.f32.partialorder %v213, 0.5
    %vm216 = vcmp.lt.f32.partialorder %v212, -0.5
    %vm217 = vcmp.lt.f32.partialorder %v213, -0.5
    %v218 = vsel %vm216, -2e+09, -1e+09
    %v219 = vsel %vm217, -2e+09, -1e+09
    %222 = vrot.lane.b32.xlu0 %v204, 96
    %v223 = vpop.permute.xlu0 %222
    %224 = vrot.lane.b32.xlu0 %v209, 96
    %v225 = vpop.permute.xlu0 %224
    %vm226 = vcmask 64512
    %v227 = vsel %vm226, %v204, 0
    %v229 = vsel %vm226, %v209, 0
    %v231 = vsel %vm226, %v223, 0
    %v233 = vsel %vm226, %v225, 0
    %235 = vmatprep.subr.mxu0 0.0
    %236 = vmatpush1.xpose.msra.mxu0 0.0
    %237 = vmatprep.subr.mxu0 0.0
    %238 = vmatpush1.xpose.msra.mxu0 0.0
    %239 = vmatprep.subr.mxu0 0.0
    %240 = vmatpush1.xpose.msra.mxu0 0.0
    %241 = vmatprep.subr.mxu0 0.0
    %242 = vmatpush1.xpose.msra.mxu0 0.0
    %243 = vmatprep.subr.mxu0 0.0
    %244 = vmatpush1.xpose.msra.mxu0 0.0
    %245 = vmatprep.subr.mxu0 0.0
    %246 = vmatpush1.xpose.msra.mxu0 0.0
    %247 = vmatprep.subr.mxu0 0.0
    %248 = vmatpush1.xpose.msra.mxu0 0.0
    %249 = vmatprep.subr.mxu0 0.0
    %250 = vmatpush1.xpose.msra.mxu0 0.0
    %251 = vmatprep.subr.mxu0 0.0
    %252 = vmatpush1.xpose.msra.mxu0 0.0
    %253 = vmatprep.subr.mxu0 0.0
    %254 = vmatpush1.xpose.msra.mxu0 0.0
    %255 = vmatprep.subr.mxu0 0.0
    %256 = vmatpush1.xpose.msra.mxu0 0.0
    %257 = vmatprep.subr.mxu0 0.0
    %258 = vmatpush1.xpose.msra.mxu0 0.0
    %259 = vmatprep.subr.mxu0 0.0
    %260 = vmatpush1.xpose.msra.mxu0 0.0
    %261 = vmatprep.subr.mxu0 0.0
    %262 = vmatpush1.xpose.msra.mxu0 0.0
    %263 = vmatprep.subr.mxu0 0.0
    %264 = vmatpush1.xpose.msra.mxu0 %v233
    %265 = vmatprep.subr.mxu0 0.0
    %266 = vmatpush1.xpose.msra.mxu0 %v231
    %267 = vmatprep.subr.mxu0 0.0
    %268 = vmatpush2.xpose.msra.mxu0 0.0
    %269 = vmatprep.subr.mxu0 0.0
    %270 = vmatpush2.xpose.msra.mxu0 0.0
    %271 = vmatprep.subr.mxu0 0.0
    %272 = vmatpush2.xpose.msra.mxu0 0.0
    %273 = vmatprep.subr.mxu0 0.0
    %274 = vmatpush2.xpose.msra.mxu0 0.0
    %275 = vmatprep.subr.mxu0 0.0
    %276 = vmatpush2.xpose.msra.mxu0 0.0
    %277 = vmatprep.subr.mxu0 0.0
    %278 = vmatpush2.xpose.msra.mxu0 0.0
    %279 = vmatprep.subr.mxu0 0.0
    %280 = vmatpush2.xpose.msra.mxu0 0.0
    %281 = vmatprep.subr.mxu0 0.0
    %282 = vmatpush2.xpose.msra.mxu0 0.0
    %283 = vmatprep.subr.mxu0 0.0
    %284 = vmatpush2.xpose.msra.mxu0 0.0
    %285 = vmatprep.subr.mxu0 0.0
    %286 = vmatpush2.xpose.msra.mxu0 0.0
    %287 = vmatprep.subr.mxu0 0.0
    %288 = vmatpush2.xpose.msra.mxu0 0.0
    %289 = vmatprep.subr.mxu0 0.0
    %290 = vmatpush2.xpose.msra.mxu0 0.0
    %291 = vmatprep.subr.mxu0 0.0
    %292 = vmatpush2.xpose.msra.mxu0 0.0
    %293 = vmatprep.subr.mxu0 0.0
    %294 = vmatpush2.xpose.msra.mxu0 0.0
    %295 = vmatprep.subr.mxu0 0.0
    %296 = vmatpush2.xpose.msra.mxu0 0.0
    %297 = vmatprep.subr.mxu0 0.0
    %298 = vmatpush2.xpose.msra.mxu0 0.0
    %299 = vmatprep.mubr.f32.mxu0 0.0
    %300 = vmatmul.mubr.f32.gmra.mxu0 %v227
    %v301 = vpop.f32.mrf.mxu0
    %v302 = vadd.f32 0.0, %v301
    %v303 = vpop.f32.mrf.mxu0
    %304 = vmatprep.mubr.f32.mxu0 0.0
    %305 = vmatmul.mubr.f32.gmra.mxu0 %v229
    %v306 = vpop.f32.mrf.mxu0
    %v307 = vadd.f32 0.0, %v306
    %v308 = vpop.f32.mrf.mxu0
    %309 = vdwg.mxu0
    %v310 = vmul.f32 %v302, 0.35355338
    %v311 = vmul.f32 %v307, 0.35355338
    %v312 = vsel %vm214, %v310, %v218
    %v313 = vsel %vm215, %v311, %v219
    %vm314 = vcmask 130048
    %v315 = vsel %vm314, %v312, -inf
    %316 = vmax.xlane.f32.xlu0 %v315
    %v317 = vpop.xlane.xlu0 %316
    %v318 = vsel %vm314, %v313, -inf
    %319 = vmax.xlane.f32.xlu0 %v318
    %v320 = vpop.xlane.xlu0 %319
    %v321 = vsub.f32 %v312, %v317
    %v322 = vsub.f32 %v313, %v320
    %v323 = vmul.f32 %v321, 1.442695
    %v324 = vpow.pop %v323
    %v325 = vmul.f32 %v322, 1.442695
    %v326 = vpow.pop %v325
    %v327 = vsel %vm314, %v324, 0.0
    %328 = vadd.xlane.f32.xlu0 %v327
    %v329 = vpop.xlane.xlu0 %328
    %v330 = vsel %vm314, %v326, 0.0
    %331 = vadd.xlane.f32.xlu0 %v330
    %v332 = vpop.xlane.xlu0 %331
    %v333 = vrcp.pop %v329
    %v334 = vrcp.pop %v332
    %v335 = vmul.f32 %v324, %v333
    %v336 = vmul.f32 %v326, %v334
    %337 = vrot.lane.b32.xlu0 %v204, 64
    %v338 = vpop.permute.xlu0 %337
    %339 = vrot.lane.b32.xlu0 %v209, 64
    %v340 = vpop.permute.xlu0 %339
    %v344 = vsel %vm314, %v335, 0
    %v347 = vsel %vm314, %v336, 0
    %349 = vmatprep.subr.mxu0 0.0
    %350 = vmatpush1.msra.mxu0 0.0
    %351 = vmatprep.subr.mxu0 0.0
    %352 = vmatpush1.msra.mxu0 0.0
    %353 = vmatprep.subr.mxu0 0.0
    %354 = vmatpush1.msra.mxu0 0.0
    %355 = vmatprep.subr.mxu0 0.0
    %356 = vmatpush1.msra.mxu0 0.0
    %357 = vmatprep.subr.mxu0 0.0
    %358 = vmatpush1.msra.mxu0 0.0
    %359 = vmatprep.subr.mxu0 0.0
    %360 = vmatpush1.msra.mxu0 0.0
    %361 = vmatprep.subr.mxu0 0.0
    %362 = vmatpush1.msra.mxu0 0.0
    %363 = vmatprep.subr.mxu0 0.0
    %364 = vmatpush1.msra.mxu0 0.0
    %365 = vmatprep.subr.mxu0 0.0
    %366 = vmatpush1.msra.mxu0 0.0
    %367 = vmatprep.subr.mxu0 0.0
    %368 = vmatpush1.msra.mxu0 0.0
    %369 = vmatprep.subr.mxu0 0.0
    %370 = vmatpush1.msra.mxu0 0.0
    %371 = vmatprep.subr.mxu0 0.0
    %372 = vmatpush1.msra.mxu0 0.0
    %373 = vmatprep.subr.mxu0 0.0
    %374 = vmatpush1.msra.mxu0 0.0
    %375 = vmatprep.subr.mxu0 0.0
    %376 = vmatpush1.msra.mxu0 0.0
    %377 = vmatprep.subr.mxu0 0.0
    %378 = vmatpush1.msra.mxu0 %v340
    %379 = vmatprep.subr.mxu0 0.0
    %380 = vmatpush1.msra.mxu0 %v338
    %381 = vmatprep.subr.mxu0 0.0
    %382 = vmatpush2.msra.mxu0 0.0
    %383 = vmatprep.subr.mxu0 0.0
    %384 = vmatpush2.msra.mxu0 0.0
    %385 = vmatprep.subr.mxu0 0.0
    %386 = vmatpush2.msra.mxu0 0.0
    %387 = vmatprep.subr.mxu0 0.0
    %388 = vmatpush2.msra.mxu0 0.0
    %389 = vmatprep.subr.mxu0 0.0
    %390 = vmatpush2.msra.mxu0 0.0
    %391 = vmatprep.subr.mxu0 0.0
    %392 = vmatpush2.msra.mxu0 0.0
    %393 = vmatprep.subr.mxu0 0.0
    %394 = vmatpush2.msra.mxu0 0.0
    %395 = vmatprep.subr.mxu0 0.0
    %396 = vmatpush2.msra.mxu0 0.0
    %397 = vmatprep.subr.mxu0 0.0
    %398 = vmatpush2.msra.mxu0 0.0
    %399 = vmatprep.subr.mxu0 0.0
    %400 = vmatpush2.msra.mxu0 0.0
    %401 = vmatprep.subr.mxu0 0.0
    %402 = vmatpush2.msra.mxu0 0.0
    %403 = vmatprep.subr.mxu0 0.0
    %404 = vmatpush2.msra.mxu0 0.0
    %405 = vmatprep.subr.mxu0 0.0
    %406 = vmatpush2.msra.mxu0 0.0
    %407 = vmatprep.subr.mxu0 0.0
    %408 = vmatpush2.msra.mxu0 0.0
    %409 = vmatprep.subr.mxu0 0.0
    %410 = vmatpush2.msra.mxu0 0.0
    %411 = vmatprep.subr.mxu0 0.0
    %412 = vmatpush2.msra.mxu0 0.0
    %413 = vmatprep.mubr.f32.mxu0 0.0
    %414 = vmatmul.mubr.f32.gmra.mxu0 %v344
    %v415 = vpop.f32.mrf.mxu0
    %v416 = vadd.f32 0.0, %v415
    %v417 = vpop.f32.mrf.mxu0
    %418 = vmatprep.mubr.f32.mxu0 0.0
    %419 = vmatmul.mubr.f32.gmra.mxu0 %v347
    %v420 = vpop.f32.mrf.mxu0
    %v421 = vadd.f32 0.0, %v420
    %v422 = vpop.f32.mrf.mxu0
    %423 = vdwg.mxu0
    %424 = vrot.lane.b32.xlu0 %v204, 120
    %v425 = vpop.permute.xlu0 %424
    %426 = vrot.lane.b32.xlu0 %v209, 120
    %v427 = vpop.permute.xlu0 %426
    %428 = vrot.lane.b32.xlu0 %v204, 88
    %v429 = vpop.permute.xlu0 %428
    %430 = vrot.lane.b32.xlu0 %v209, 88
    %v431 = vpop.permute.xlu0 %430
    %v432 = vsel %vm226, %v425, 0
    %v434 = vsel %vm226, %v427, 0
    %v436 = vsel %vm226, %v429, 0
    %v438 = vsel %vm226, %v431, 0
    %440 = vmatprep.subr.mxu0 0.0
    %441 = vmatpush1.xpose.msra.mxu0 0.0
    %442 = vmatprep.subr.mxu0 0.0
    %443 = vmatpush1.xpose.msra.mxu0 0.0
    %444 = vmatprep.subr.mxu0 0.0
    %445 = vmatpush1.xpose.msra.mxu0 0.0
    %446 = vmatprep.subr.mxu0 0.0
    %447 = vmatpush1.xpose.msra.mxu0 0.0
    %448 = vmatprep.subr.mxu0 0.0
    %449 = vmatpush1.xpose.msra.mxu0 0.0
    %450 = vmatprep.subr.mxu0 0.0
    %451 = vmatpush1.xpose.msra.mxu0 0.0
    %452 = vmatprep.subr.mxu0 0.0
    %453 = vmatpush1.xpose.msra.mxu0 0.0
    %454 = vmatprep.subr.mxu0 0.0
    %455 = vmatpush1.xpose.msra.mxu0 0.0
    %456 = vmatprep.subr.mxu0 0.0
    %457 = vmatpush1.xpose.msra.mxu0 0.0
    %458 = vmatprep.subr.mxu0 0.0
    %459 = vmatpush1.xpose.msra.mxu0 0.0
    %460 = vmatprep.subr.mxu0 0.0
    %461 = vmatpush1.xpose.msra.mxu0 0.0
    %462 = vmatprep.subr.mxu0 0.0
    %463 = vmatpush1.xpose.msra.mxu0 0.0
    %464 = vmatprep.subr.mxu0 0.0
    %465 = vmatpush1.xpose.msra.mxu0 0.0
    %466 = vmatprep.subr.mxu0 0.0
    %467 = vmatpush1.xpose.msra.mxu0 0.0
    %468 = vmatprep.subr.mxu0 0.0
    %469 = vmatpush1.xpose.msra.mxu0 %v438
    %470 = vmatprep.subr.mxu0 0.0
    %471 = vmatpush1.xpose.msra.mxu0 %v436
    %472 = vmatprep.subr.mxu0 0.0
    %473 = vmatpush2.xpose.msra.mxu0 0.0
    %474 = vmatprep.subr.mxu0 0.0
    %475 = vmatpush2.xpose.msra.mxu0 0.0
    %476 = vmatprep.subr.mxu0 0.0
    %477 = vmatpush2.xpose.msra.mxu0 0.0
    %478 = vmatprep.subr.mxu0 0.0
    %479 = vmatpush2.xpose.msra.mxu0 0.0
    %480 = vmatprep.subr.mxu0 0.0
    %481 = vmatpush2.xpose.msra.mxu0 0.0
    %482 = vmatprep.subr.mxu0 0.0
    %483 = vmatpush2.xpose.msra.mxu0 0.0
    %484 = vmatprep.subr.mxu0 0.0
    %485 = vmatpush2.xpose.msra.mxu0 0.0
    %486 = vmatprep.subr.mxu0 0.0
    %487 = vmatpush2.xpose.msra.mxu0 0.0
    %488 = vmatprep.subr.mxu0 0.0
    %489 = vmatpush2.xpose.msra.mxu0 0.0
    %490 = vmatprep.subr.mxu0 0.0
    %491 = vmatpush2.xpose.msra.mxu0 0.0
    %492 = vmatprep.subr.mxu0 0.0
    %493 = vmatpush2.xpose.msra.mxu0 0.0
    %494 = vmatprep.subr.mxu0 0.0
    %495 = vmatpush2.xpose.msra.mxu0 0.0
    %496 = vmatprep.subr.mxu0 0.0
    %497 = vmatpush2.xpose.msra.mxu0 0.0
    %498 = vmatprep.subr.mxu0 0.0
    %499 = vmatpush2.xpose.msra.mxu0 0.0
    %500 = vmatprep.subr.mxu0 0.0
    %501 = vmatpush2.xpose.msra.mxu0 0.0
    %502 = vmatprep.subr.mxu0 0.0
    %503 = vmatpush2.xpose.msra.mxu0 0.0
    %504 = vmatprep.mubr.f32.mxu0 0.0
    %505 = vmatmul.mubr.f32.gmra.mxu0 %v432
    %v506 = vpop.f32.mrf.mxu0
    %v507 = vadd.f32 0.0, %v506
    %v508 = vpop.f32.mrf.mxu0
    %509 = vmatprep.mubr.f32.mxu0 0.0
    %510 = vmatmul.mubr.f32.gmra.mxu0 %v434
    %v511 = vpop.f32.mrf.mxu0
    %v512 = vadd.f32 0.0, %v511
    %v513 = vpop.f32.mrf.mxu0
    %514 = vdwg.mxu0
    %v515 = vmul.f32 %v507, 0.35355338
    %v516 = vmul.f32 %v512, 0.35355338
    %v517 = vsel %vm214, %v515, %v218
    %v518 = vsel %vm215, %v516, %v219
    %v519 = vsel %vm314, %v517, -inf
    %520 = vmax.xlane.f32.xlu0 %v519
    %v521 = vpop.xlane.xlu0 %520
    %v522 = vsel %vm314, %v518, -inf
    %523 = vmax.xlane.f32.xlu0 %v522
    %v524 = vpop.xlane.xlu0 %523
    %v525 = vsub.f32 %v517, %v521
    %v526 = vsub.f32 %v518, %v524
    %v527 = vmul.f32 %v525, 1.442695
    %v528 = vpow.pop %v527
    %v529 = vmul.f32 %v526, 1.442695
    %v530 = vpow.pop %v529
    %v531 = vsel %vm314, %v528, 0.0
    %532 = vadd.xlane.f32.xlu0 %v531
    %v533 = vpop.xlane.xlu0 %532
    %v534 = vsel %vm314, %v530, 0.0
    %535 = vadd.xlane.f32.xlu0 %v534
    %v536 = vpop.xlane.xlu0 %535
    %v537 = vrcp.pop %v533
    %v538 = vrcp.pop %v536
    %v539 = vmul.f32 %v528, %v537
    %v540 = vmul.f32 %v530, %v538
    %541 = vrot.lane.b32.xlu0 %v204, 56
    %v542 = vpop.permute.xlu0 %541
    %543 = vrot.lane.b32.xlu0 %v209, 56
    %v544 = vpop.permute.xlu0 %543
    %v548 = vsel %vm314, %v539, 0
    %v551 = vsel %vm314, %v540, 0
    %553 = vmatprep.subr.mxu0 0.0
    %554 = vmatpush1.msra.mxu0 0.0
    %555 = vmatprep.subr.mxu0 0.0
    %556 = vmatpush1.msra.mxu0 0.0
    %557 = vmatprep.subr.mxu0 0.0
    %558 = vmatpush1.msra.mxu0 0.0
    %559 = vmatprep.subr.mxu0 0.0
    %560 = vmatpush1.msra.mxu0 0.0
    %561 = vmatprep.subr.mxu0 0.0
    %562 = vmatpush1.msra.mxu0 0.0
    %563 = vmatprep.subr.mxu0 0.0
    %564 = vmatpush1.msra.mxu0 0.0
    %565 = vmatprep.subr.mxu0 0.0
    %566 = vmatpush1.msra.mxu0 0.0
    %567 = vmatprep.subr.mxu0 0.0
    %568 = vmatpush1.msra.mxu0 0.0
    %569 = vmatprep.subr.mxu0 0.0
    %570 = vmatpush1.msra.mxu0 0.0
    %571 = vmatprep.subr.mxu0 0.0
    %572 = vmatpush1.msra.mxu0 0.0
    %573 = vmatprep.subr.mxu0 0.0
    %574 = vmatpush1.msra.mxu0 0.0
    %575 = vmatprep.subr.mxu0 0.0
    %576 = vmatpush1.msra.mxu0 0.0
    %577 = vmatprep.subr.mxu0 0.0
    %578 = vmatpush1.msra.mxu0 0.0
    %579 = vmatprep.subr.mxu0 0.0
    %580 = vmatpush1.msra.mxu0 0.0
    %581 = vmatprep.subr.mxu0 0.0
    %582 = vmatpush1.msra.mxu0 %v544
    %583 = vmatprep.subr.mxu0 0.0
    %584 = vmatpush1.msra.mxu0 %v542
    %585 = vmatprep.subr.mxu0 0.0
    %586 = vmatpush2.msra.mxu0 0.0
    %587 = vmatprep.subr.mxu0 0.0
    %588 = vmatpush2.msra.mxu0 0.0
    %589 = vmatprep.subr.mxu0 0.0
    %590 = vmatpush2.msra.mxu0 0.0
    %591 = vmatprep.subr.mxu0 0.0
    %592 = vmatpush2.msra.mxu0 0.0
    %593 = vmatprep.subr.mxu0 0.0
    %594 = vmatpush2.msra.mxu0 0.0
    %595 = vmatprep.subr.mxu0 0.0
    %596 = vmatpush2.msra.mxu0 0.0
    %597 = vmatprep.subr.mxu0 0.0
    %598 = vmatpush2.msra.mxu0 0.0
    %599 = vmatprep.subr.mxu0 0.0
    %600 = vmatpush2.msra.mxu0 0.0
    %601 = vmatprep.subr.mxu0 0.0
    %602 = vmatpush2.msra.mxu0 0.0
    %603 = vmatprep.subr.mxu0 0.0
    %604 = vmatpush2.msra.mxu0 0.0
    %605 = vmatprep.subr.mxu0 0.0
    %606 = vmatpush2.msra.mxu0 0.0
    %607 = vmatprep.subr.mxu0 0.0
    %608 = vmatpush2.msra.mxu0 0.0
    %609 = vmatprep.subr.mxu0 0.0
    %610 = vmatpush2.msra.mxu0 0.0
    %611 = vmatprep.subr.mxu0 0.0
    %612 = vmatpush2.msra.mxu0 0.0
    %613 = vmatprep.subr.mxu0 0.0
    %614 = vmatpush2.msra.mxu0 0.0
    %615 = vmatprep.subr.mxu0 0.0
    %616 = vmatpush2.msra.mxu0 0.0
    %617 = vmatprep.mubr.f32.mxu0 0.0
    %618 = vmatmul.mubr.f32.gmra.mxu0 %v548
    %v619 = vpop.f32.mrf.mxu0
    %v620 = vadd.f32 0.0, %v619
    %v621 = vpop.f32.mrf.mxu0
    %622 = vmatprep.mubr.f32.mxu0 0.0
    %623 = vmatmul.mubr.f32.gmra.mxu0 %v551
    %v624 = vpop.f32.mrf.mxu0
    %v625 = vadd.f32 0.0, %v624
    %v626 = vpop.f32.mrf.mxu0
    %627 = vdwg.mxu0
    %628 = vrot.lane.b32.xlu0 %v204, 112
    %v629 = vpop.permute.xlu0 %628
    %630 = vrot.lane.b32.xlu0 %v209, 112
    %v631 = vpop.permute.xlu0 %630
    %632 = vrot.lane.b32.xlu0 %v204, 80
    %v633 = vpop.permute.xlu0 %632
    %634 = vrot.lane.b32.xlu0 %v209, 80
    %v635 = vpop.permute.xlu0 %634
    %v636 = vsel %vm226, %v629, 0
    %v638 = vsel %vm226, %v631, 0
    %v640 = vsel %vm226, %v633, 0
    %v642 = vsel %vm226, %v635, 0
    %644 = vmatprep.subr.mxu0 0.0
    %645 = vmatpush1.xpose.msra.mxu0 0.0
    %646 = vmatprep.subr.mxu0 0.0
    %647 = vmatpush1.xpose.msra.mxu0 0.0
    %648 = vmatprep.subr.mxu0 0.0
    %649 = vmatpush1.xpose.msra.mxu0 0.0
    %650 = vmatprep.subr.mxu0 0.0
    %651 = vmatpush1.xpose.msra.mxu0 0.0
    %652 = vmatprep.subr.mxu0 0.0
    %653 = vmatpush1.xpose.msra.mxu0 0.0
    %654 = vmatprep.subr.mxu0 0.0
    %655 = vmatpush1.xpose.msra.mxu0 0.0
    %656 = vmatprep.subr.mxu0 0.0
    %657 = vmatpush1.xpose.msra.mxu0 0.0
    %658 = vmatprep.subr.mxu0 0.0
    %659 = vmatpush1.xpose.msra.mxu0 0.0
    %660 = vmatprep.subr.mxu0 0.0
    %661 = vmatpush1.xpose.msra.mxu0 0.0
    %662 = vmatprep.subr.mxu0 0.0
    %663 = vmatpush1.xpose.msra.mxu0 0.0
    %664 = vmatprep.subr.mxu0 0.0
    %665 = vmatpush1.xpose.msra.mxu0 0.0
    %666 = vmatprep.subr.mxu0 0.0
    %667 = vmatpush1.xpose.msra.mxu0 0.0
    %668 = vmatprep.subr.mxu0 0.0
    %669 = vmatpush1.xpose.msra.mxu0 0.0
    %670 = vmatprep.subr.mxu0 0.0
    %671 = vmatpush1.xpose.msra.mxu0 0.0
    %672 = vmatprep.subr.mxu0 0.0
    %673 = vmatpush1.xpose.msra.mxu0 %v642
    %674 = vmatprep.subr.mxu0 0.0
    %675 = vmatpush1.xpose.msra.mxu0 %v640
    %676 = vmatprep.subr.mxu0 0.0
    %677 = vmatpush2.xpose.msra.mxu0 0.0
    %678 = vmatprep.subr.mxu0 0.0
    %679 = vmatpush2.xpose.msra.mxu0 0.0
    %680 = vmatprep.subr.mxu0 0.0
    %681 = vmatpush2.xpose.msra.mxu0 0.0
    %682 = vmatprep.subr.mxu0 0.0
    %683 = vmatpush2.xpose.msra.mxu0 0.0
    %684 = vmatprep.subr.mxu0 0.0
    %685 = vmatpush2.xpose.msra.mxu0 0.0
    %686 = vmatprep.subr.mxu0 0.0
    %687 = vmatpush2.xpose.msra.mxu0 0.0
    %688 = vmatprep.subr.mxu0 0.0
    %689 = vmatpush2.xpose.msra.mxu0 0.0
    %690 = vmatprep.subr.mxu0 0.0
    %691 = vmatpush2.xpose.msra.mxu0 0.0
    %692 = vmatprep.subr.mxu0 0.0
    %693 = vmatpush2.xpose.msra.mxu0 0.0
    %694 = vmatprep.subr.mxu0 0.0
    %695 = vmatpush2.xpose.msra.mxu0 0.0
    %696 = vmatprep.subr.mxu0 0.0
    %697 = vmatpush2.xpose.msra.mxu0 0.0
    %698 = vmatprep.subr.mxu0 0.0
    %699 = vmatpush2.xpose.msra.mxu0 0.0
    %700 = vmatprep.subr.mxu0 0.0
    %701 = vmatpush2.xpose.msra.mxu0 0.0
    %702 = vmatprep.subr.mxu0 0.0
    %703 = vmatpush2.xpose.msra.mxu0 0.0
    %704 = vmatprep.subr.mxu0 0.0
    %705 = vmatpush2.xpose.msra.mxu0 0.0
    %706 = vmatprep.subr.mxu0 0.0
    %707 = vmatpush2.xpose.msra.mxu0 0.0
    %708 = vmatprep.mubr.f32.mxu0 0.0
    %709 = vmatmul.mubr.f32.gmra.mxu0 %v636
    %v710 = vpop.f32.mrf.mxu0
    %v711 = vadd.f32 0.0, %v710
    %v712 = vpop.f32.mrf.mxu0
    %713 = vmatprep.mubr.f32.mxu0 0.0
    %714 = vmatmul.mubr.f32.gmra.mxu0 %v638
    %v715 = vpop.f32.mrf.mxu0
    %v716 = vadd.f32 0.0, %v715
    %v717 = vpop.f32.mrf.mxu0
    %718 = vdwg.mxu0
    %v719 = vmul.f32 %v711, 0.35355338
    %v720 = vmul.f32 %v716, 0.35355338
    %v721 = vsel %vm214, %v719, %v218
    %v722 = vsel %vm215, %v720, %v219
    %v723 = vsel %vm314, %v721, -inf
    %724 = vmax.xlane.f32.xlu0 %v723
    %v725 = vpop.xlane.xlu0 %724
    %v726 = vsel %vm314, %v722, -inf
    %727 = vmax.xlane.f32.xlu0 %v726
    %v728 = vpop.xlane.xlu0 %727
    %v729 = vsub.f32 %v721, %v725
    %v730 = vsub.f32 %v722, %v728
    %v731 = vmul.f32 %v729, 1.442695
    %v732 = vpow.pop %v731
    %v733 = vmul.f32 %v730, 1.442695
    %v734 = vpow.pop %v733
    %v735 = vsel %vm314, %v732, 0.0
    %736 = vadd.xlane.f32.xlu0 %v735
    %v737 = vpop.xlane.xlu0 %736
    %v738 = vsel %vm314, %v734, 0.0
    %739 = vadd.xlane.f32.xlu0 %v738
    %v740 = vpop.xlane.xlu0 %739
    %v741 = vrcp.pop %v737
    %v742 = vrcp.pop %v740
    %v743 = vmul.f32 %v732, %v741
    %v744 = vmul.f32 %v734, %v742
    %745 = vrot.lane.b32.xlu0 %v204, 48
    %v746 = vpop.permute.xlu0 %745
    %747 = vrot.lane.b32.xlu0 %v209, 48
    %v748 = vpop.permute.xlu0 %747
    %v752 = vsel %vm314, %v743, 0
    %v755 = vsel %vm314, %v744, 0
    %757 = vmatprep.subr.mxu0 0.0
    %758 = vmatpush1.msra.mxu0 0.0
    %759 = vmatprep.subr.mxu0 0.0
    %760 = vmatpush1.msra.mxu0 0.0
    %761 = vmatprep.subr.mxu0 0.0
    %762 = vmatpush1.msra.mxu0 0.0
    %763 = vmatprep.subr.mxu0 0.0
    %764 = vmatpush1.msra.mxu0 0.0
    %765 = vmatprep.subr.mxu0 0.0
    %766 = vmatpush1.msra.mxu0 0.0
    %767 = vmatprep.subr.mxu0 0.0
    %768 = vmatpush1.msra.mxu0 0.0
    %769 = vmatprep.subr.mxu0 0.0
    %770 = vmatpush1.msra.mxu0 0.0
    %771 = vmatprep.subr.mxu0 0.0
    %772 = vmatpush1.msra.mxu0 0.0
    %773 = vmatprep.subr.mxu0 0.0
    %774 = vmatpush1.msra.mxu0 0.0
    %775 = vmatprep.subr.mxu0 0.0
    %776 = vmatpush1.msra.mxu0 0.0
    %777 = vmatprep.subr.mxu0 0.0
    %778 = vmatpush1.msra.mxu0 0.0
    %779 = vmatprep.subr.mxu0 0.0
    %780 = vmatpush1.msra.mxu0 0.0
    %781 = vmatprep.subr.mxu0 0.0
    %782 = vmatpush1.msra.mxu0 0.0
    %783 = vmatprep.subr.mxu0 0.0
    %784 = vmatpush1.msra.mxu0 0.0
    %785 = vmatprep.subr.mxu0 0.0
    %786 = vmatpush1.msra.mxu0 %v748
    %787 = vmatprep.subr.mxu0 0.0
    %788 = vmatpush1.msra.mxu0 %v746
    %789 = vmatprep.subr.mxu0 0.0
    %790 = vmatpush2.msra.mxu0 0.0
    %791 = vmatprep.subr.mxu0 0.0
    %792 = vmatpush2.msra.mxu0 0.0
    %793 = vmatprep.subr.mxu0 0.0
    %794 = vmatpush2.msra.mxu0 0.0
    %795 = vmatprep.subr.mxu0 0.0
    %796 = vmatpush2.msra.mxu0 0.0
    %797 = vmatprep.subr.mxu0 0.0
    %798 = vmatpush2.msra.mxu0 0.0
    %799 = vmatprep.subr.mxu0 0.0
    %800 = vmatpush2.msra.mxu0 0.0
    %801 = vmatprep.subr.mxu0 0.0
    %802 = vmatpush2.msra.mxu0 0.0
    %803 = vmatprep.subr.mxu0 0.0
    %804 = vmatpush2.msra.mxu0 0.0
    %805 = vmatprep.subr.mxu0 0.0
    %806 = vmatpush2.msra.mxu0 0.0
    %807 = vmatprep.subr.mxu0 0.0
    %808 = vmatpush2.msra.mxu0 0.0
    %809 = vmatprep.subr.mxu0 0.0
    %810 = vmatpush2.msra.mxu0 0.0
    %811 = vmatprep.subr.mxu0 0.0
    %812 = vmatpush2.msra.mxu0 0.0
    %813 = vmatprep.subr.mxu0 0.0
    %814 = vmatpush2.msra.mxu0 0.0
    %815 = vmatprep.subr.mxu0 0.0
    %816 = vmatpush2.msra.mxu0 0.0
    %817 = vmatprep.subr.mxu0 0.0
    %818 = vmatpush2.msra.mxu0 0.0
    %819 = vmatprep.subr.mxu0 0.0
    %820 = vmatpush2.msra.mxu0 0.0
    %821 = vmatprep.mubr.f32.mxu0 0.0
    %822 = vmatmul.mubr.f32.gmra.mxu0 %v752
    %v823 = vpop.f32.mrf.mxu0
    %v824 = vadd.f32 0.0, %v823
    %v825 = vpop.f32.mrf.mxu0
    %826 = vmatprep.mubr.f32.mxu0 0.0
    %827 = vmatmul.mubr.f32.gmra.mxu0 %v755
    %v828 = vpop.f32.mrf.mxu0
    %v829 = vadd.f32 0.0, %v828
    %v830 = vpop.f32.mrf.mxu0
    %831 = vdwg.mxu0
    %832 = vrot.lane.b32.xlu0 %v204, 104
    %v833 = vpop.permute.xlu0 %832
    %834 = vrot.lane.b32.xlu0 %v209, 104
    %v835 = vpop.permute.xlu0 %834
    %836 = vrot.lane.b32.xlu0 %v204, 72
    %v837 = vpop.permute.xlu0 %836
    %838 = vrot.lane.b32.xlu0 %v209, 72
    %v839 = vpop.permute.xlu0 %838
    %v840 = vsel %vm226, %v833, 0
    %v842 = vsel %vm226, %v835, 0
    %v844 = vsel %vm226, %v837, 0
    %v846 = vsel %vm226, %v839, 0
    %848 = vmatprep.subr.mxu0 0.0
    %849 = vmatpush1.xpose.msra.mxu0 0.0
    %850 = vmatprep.subr.mxu0 0.0
    %851 = vmatpush1.xpose.msra.mxu0 0.0
    %852 = vmatprep.subr.mxu0 0.0
    %853 = vmatpush1.xpose.msra.mxu0 0.0
    %854 = vmatprep.subr.mxu0 0.0
    %855 = vmatpush1.xpose.msra.mxu0 0.0
    %856 = vmatprep.subr.mxu0 0.0
    %857 = vmatpush1.xpose.msra.mxu0 0.0
    %858 = vmatprep.subr.mxu0 0.0
    %859 = vmatpush1.xpose.msra.mxu0 0.0
    %860 = vmatprep.subr.mxu0 0.0
    %861 = vmatpush1.xpose.msra.mxu0 0.0
    %862 = vmatprep.subr.mxu0 0.0
    %863 = vmatpush1.xpose.msra.mxu0 0.0
    %864 = vmatprep.subr.mxu0 0.0
    %865 = vmatpush1.xpose.msra.mxu0 0.0
    %866 = vmatprep.subr.mxu0 0.0
    %867 = vmatpush1.xpose.msra.mxu0 0.0
    %868 = vmatprep.subr.mxu0 0.0
    %869 = vmatpush1.xpose.msra.mxu0 0.0
    %870 = vmatprep.subr.mxu0 0.0
    %871 = vmatpush1.xpose.msra.mxu0 0.0
    %872 = vmatprep.subr.mxu0 0.0
    %873 = vmatpush1.xpose.msra.mxu0 0.0
    %874 = vmatprep.subr.mxu0 0.0
    %875 = vmatpush1.xpose.msra.mxu0 0.0
    %876 = vmatprep.subr.mxu0 0.0
    %877 = vmatpush1.xpose.msra.mxu0 %v846
    %878 = vmatprep.subr.mxu0 0.0
    %879 = vmatpush1.xpose.msra.mxu0 %v844
    %880 = vmatprep.subr.mxu0 0.0
    %881 = vmatpush2.xpose.msra.mxu0 0.0
    %882 = vmatprep.subr.mxu0 0.0
    %883 = vmatpush2.xpose.msra.mxu0 0.0
    %884 = vmatprep.subr.mxu0 0.0
    %885 = vmatpush2.xpose.msra.mxu0 0.0
    %886 = vmatprep.subr.mxu0 0.0
    %887 = vmatpush2.xpose.msra.mxu0 0.0
    %888 = vmatprep.subr.mxu0 0.0
    %889 = vmatpush2.xpose.msra.mxu0 0.0
    %890 = vmatprep.subr.mxu0 0.0
    %891 = vmatpush2.xpose.msra.mxu0 0.0
    %892 = vmatprep.subr.mxu0 0.0
    %893 = vmatpush2.xpose.msra.mxu0 0.0
    %894 = vmatprep.subr.mxu0 0.0
    %895 = vmatpush2.xpose.msra.mxu0 0.0
    %896 = vmatprep.subr.mxu0 0.0
    %897 = vmatpush2.xpose.msra.mxu0 0.0
    %898 = vmatprep.subr.mxu0 0.0
    %899 = vmatpush2.xpose.msra.mxu0 0.0
    %900 = vmatprep.subr.mxu0 0.0
    %901 = vmatpush2.xpose.msra.mxu0 0.0
    %902 = vmatprep.subr.mxu0 0.0
    %903 = vmatpush2.xpose.msra.mxu0 0.0
    %904 = vmatprep.subr.mxu0 0.0
    %905 = vmatpush2.xpose.msra.mxu0 0.0
    %906 = vmatprep.subr.mxu0 0.0
    %907 = vmatpush2.xpose.msra.mxu0 0.0
    %908 = vmatprep.subr.mxu0 0.0
    %909 = vmatpush2.xpose.msra.mxu0 0.0
    %910 = vmatprep.subr.mxu0 0.0
    %911 = vmatpush2.xpose.msra.mxu0 0.0
    %912 = vmatprep.mubr.f32.mxu0 0.0
    %913 = vmatmul.mubr.f32.gmra.mxu0 %v840
    %v914 = vpop.f32.mrf.mxu0
    %v915 = vadd.f32 0.0, %v914
    %v916 = vpop.f32.mrf.mxu0
    %917 = vmatprep.mubr.f32.mxu0 0.0
    %918 = vmatmul.mubr.f32.gmra.mxu0 %v842
    %v919 = vpop.f32.mrf.mxu0
    %v920 = vadd.f32 0.0, %v919
    %v921 = vpop.f32.mrf.mxu0
    %922 = vdwg.mxu0
    %v923 = vmul.f32 %v915, 0.35355338
    %v924 = vmul.f32 %v920, 0.35355338
    %v925 = vsel %vm214, %v923, %v218
    %v926 = vsel %vm215, %v924, %v219
    %v927 = vsel %vm314, %v925, -inf
    %928 = vmax.xlane.f32.xlu0 %v927
    %v929 = vpop.xlane.xlu0 %928
    %v930 = vsel %vm314, %v926, -inf
    %931 = vmax.xlane.f32.xlu0 %v930
    %v932 = vpop.xlane.xlu0 %931
    %v933 = vsub.f32 %v925, %v929
    %v934 = vsub.f32 %v926, %v932
    %v935 = vmul.f32 %v933, 1.442695
    %v936 = vpow.pop %v935
    %v937 = vmul.f32 %v934, 1.442695
    %v938 = vpow.pop %v937
    %v939 = vsel %vm314, %v936, 0.0
    %940 = vadd.xlane.f32.xlu0 %v939
    %v941 = vpop.xlane.xlu0 %940
    %v942 = vsel %vm314, %v938, 0.0
    %943 = vadd.xlane.f32.xlu0 %v942
    %v944 = vpop.xlane.xlu0 %943
    %v945 = vrcp.pop %v941
    %v946 = vrcp.pop %v944
    %v947 = vmul.f32 %v936, %v945
    %v948 = vmul.f32 %v938, %v946
    %949 = vrot.lane.b32.xlu0 %v204, 40
    %v950 = vpop.permute.xlu0 %949
    %951 = vrot.lane.b32.xlu0 %v209, 40
    %v952 = vpop.permute.xlu0 %951
    %v956 = vsel %vm314, %v947, 0
    %v959 = vsel %vm314, %v948, 0
    %961 = vmatprep.subr.mxu0 0.0
    %962 = vmatpush1.msra.mxu0 0.0
    %963 = vmatprep.subr.mxu0 0.0
    %964 = vmatpush1.msra.mxu0 0.0
    %965 = vmatprep.subr.mxu0 0.0
    %966 = vmatpush1.msra.mxu0 0.0
    %967 = vmatprep.subr.mxu0 0.0
    %968 = vmatpush1.msra.mxu0 0.0
    %969 = vmatprep.subr.mxu0 0.0
    %970 = vmatpush1.msra.mxu0 0.0
    %971 = vmatprep.subr.mxu0 0.0
    %972 = vmatpush1.msra.mxu0 0.0
    %973 = vmatprep.subr.mxu0 0.0
    %974 = vmatpush1.msra.mxu0 0.0
    %975 = vmatprep.subr.mxu0 0.0
    %976 = vmatpush1.msra.mxu0 0.0
    %977 = vmatprep.subr.mxu0 0.0
    %978 = vmatpush1.msra.mxu0 0.0
    %979 = vmatprep.subr.mxu0 0.0
    %980 = vmatpush1.msra.mxu0 0.0
    %981 = vmatprep.subr.mxu0 0.0
    %982 = vmatpush1.msra.mxu0 0.0
    %983 = vmatprep.subr.mxu0 0.0
    %984 = vmatpush1.msra.mxu0 0.0
    %985 = vmatprep.subr.mxu0 0.0
    %986 = vmatpush1.msra.mxu0 0.0
    %987 = vmatprep.subr.mxu0 0.0
    %988 = vmatpush1.msra.mxu0 0.0
    %989 = vmatprep.subr.mxu0 0.0
    %990 = vmatpush1.msra.mxu0 %v952
    %991 = vmatprep.subr.mxu0 0.0
    %992 = vmatpush1.msra.mxu0 %v950
    %993 = vmatprep.subr.mxu0 0.0
    %994 = vmatpush2.msra.mxu0 0.0
    %995 = vmatprep.subr.mxu0 0.0
    %996 = vmatpush2.msra.mxu0 0.0
    %997 = vmatprep.subr.mxu0 0.0
    %998 = vmatpush2.msra.mxu0 0.0
    %999 = vmatprep.subr.mxu0 0.0
    %1000 = vmatpush2.msra.mxu0 0.0
    %1001 = vmatprep.subr.mxu0 0.0
    %1002 = vmatpush2.msra.mxu0 0.0
    %1003 = vmatprep.subr.mxu0 0.0
    %1004 = vmatpush2.msra.mxu0 0.0
    %1005 = vmatprep.subr.mxu0 0.0
    %1006 = vmatpush2.msra.mxu0 0.0
    %1007 = vmatprep.subr.mxu0 0.0
    %1008 = vmatpush2.msra.mxu0 0.0
    %1009 = vmatprep.subr.mxu0 0.0
    %1010 = vmatpush2.msra.mxu0 0.0
    %1011 = vmatprep.subr.mxu0 0.0
    %1012 = vmatpush2.msra.mxu0 0.0
    %1013 = vmatprep.subr.mxu0 0.0
    %1014 = vmatpush2.msra.mxu0 0.0
    %1015 = vmatprep.subr.mxu0 0.0
    %1016 = vmatpush2.msra.mxu0 0.0
    %1017 = vmatprep.subr.mxu0 0.0
    %1018 = vmatpush2.msra.mxu0 0.0
    %1019 = vmatprep.subr.mxu0 0.0
    %1020 = vmatpush2.msra.mxu0 0.0
    %1021 = vmatprep.subr.mxu0 0.0
    %1022 = vmatpush2.msra.mxu0 0.0
    %1023 = vmatprep.subr.mxu0 0.0
    %1024 = vmatpush2.msra.mxu0 0.0
    %1025 = vmatprep.mubr.f32.mxu0 0.0
    %1026 = vmatmul.mubr.f32.gmra.mxu0 %v956
    %v1027 = vpop.f32.mrf.mxu0
    %v1028 = vadd.f32 0.0, %v1027
    %v1029 = vpop.f32.mrf.mxu0
    %1030 = vmatprep.mubr.f32.mxu0 0.0
    %1031 = vmatmul.mubr.f32.gmra.mxu0 %v959
    %v1032 = vpop.f32.mrf.mxu0
    %v1033 = vadd.f32 0.0, %v1032
    %v1034 = vpop.f32.mrf.mxu0
    %1035 = vdwg.mxu0
    %1038 = vrot.lane.b32.xlu0 %v620, 8
    %v1039 = vpop.permute.xlu0 %1038
    %1040 = vrot.lane.b32.xlu0 %v625, 8
    %v1041 = vpop.permute.xlu0 %1040
    %1046 = vrot.lane.b32.xlu0 %v824, 16
    %v1047 = vpop.permute.xlu0 %1046
    %1048 = vrot.lane.b32.xlu0 %v829, 16
    %v1049 = vpop.permute.xlu0 %1048
    %1054 = vrot.lane.b32.xlu0 %v1028, 24
    %v1055 = vpop.permute.xlu0 %1054
    %1056 = vrot.lane.b32.xlu0 %v1033, 24
    %v1057 = vpop.permute.xlu0 %1056
    %v1060 = vsel %vm226, %v416, %v1039
    %v1061 = vsel %vm226, %v421, %v1041
    %v1062 = vsel %vm314, %v1060, %v1047
    %v1063 = vsel %vm314, %v1061, %v1049
    %vm1064 = vcmask 195584
    %v1065 = vsel %vm1064, %v1062, %v1055
    %v1066 = vsel %vm1064, %v1063, %v1057
    %1067 = vrot.lane.b32.xlu0 %v129, 32
    %v1068 = vpop.permute.xlu0 %1067
    %v1070 = vadd.f32 %v76, %v1068
    %v1071 = vadd.f32 %v77, %v1068
    %v1072 = vld [vmem:[#allocation8] sm:$0xff]
    %v1073 = vld [vmem:[#allocation8 + $0x8] sm:$0xff]
    %v1074 = vld [vmem:[#allocation8 + $0x10] sm:$0xff]
    %v1075 = vld [vmem:[#allocation8 + $0x18] sm:$0xff]
    %v1077 = vsel %vm78, %v1065, 0
    %v1080 = vsel %vm78, %v1066, 0
    %1082 = vmatprep.subr.mxu0 0.0
    %1083 = vmatpush1.msra.mxu0 0.0
    %1084 = vmatprep.subr.mxu0 0.0
    %1085 = vmatpush1.msra.mxu0 0.0
    %1086 = vmatprep.subr.mxu0 0.0
    %1087 = vmatpush1.msra.mxu0 0.0
    %1088 = vmatprep.subr.mxu0 0.0
    %1089 = vmatpush1.msra.mxu0 0.0
    %1090 = vmatprep.subr.mxu0 0.0
    %1091 = vmatpush1.msra.mxu0 0.0
    %1092 = vmatprep.subr.mxu0 0.0
    %1093 = vmatpush1.msra.mxu0 0.0
    %1094 = vmatprep.subr.mxu0 0.0
    %1095 = vmatpush1.msra.mxu0 0.0
    %1096 = vmatprep.subr.mxu0 0.0
    %1097 = vmatpush1.msra.mxu0 0.0
    %1098 = vmatprep.subr.mxu0 0.0
    %1099 = vmatpush1.msra.mxu0 0.0
    %1100 = vmatprep.subr.mxu0 0.0
    %1101 = vmatpush1.msra.mxu0 0.0
    %1102 = vmatprep.subr.mxu0 0.0
    %1103 = vmatpush1.msra.mxu0 0.0
    %1104 = vmatprep.subr.mxu0 0.0
    %1105 = vmatpush1.msra.mxu0 0.0
    %1106 = vmatprep.subr.mxu0 0.0
    %1107 = vmatpush1.msra.mxu0 %v1075
    %1108 = vmatprep.subr.mxu0 0.0
    %1109 = vmatpush1.msra.mxu0 %v1074
    %1110 = vmatprep.subr.mxu0 0.0
    %1111 = vmatpush1.msra.mxu0 %v1073
    %1112 = vmatprep.subr.mxu0 0.0
    %1113 = vmatpush1.msra.mxu0 %v1072
    %1114 = vmatprep.subr.mxu0 0.0
    %1115 = vmatpush2.msra.mxu0 0.0
    %1116 = vmatprep.subr.mxu0 0.0
    %1117 = vmatpush2.msra.mxu0 0.0
    %1118 = vmatprep.subr.mxu0 0.0
    %1119 = vmatpush2.msra.mxu0 0.0
    %1120 = vmatprep.subr.mxu0 0.0
    %1121 = vmatpush2.msra.mxu0 0.0
    %1122 = vmatprep.subr.mxu0 0.0
    %1123 = vmatpush2.msra.mxu0 0.0
    %1124 = vmatprep.subr.mxu0 0.0
    %1125 = vmatpush2.msra.mxu0 0.0
    %1126 = vmatprep.subr.mxu0 0.0
    %1127 = vmatpush2.msra.mxu0 0.0
    %1128 = vmatprep.subr.mxu0 0.0
    %1129 = vmatpush2.msra.mxu0 0.0
    %1130 = vmatprep.subr.mxu0 0.0
    %1131 = vmatpush2.msra.mxu0 0.0
    %1132 = vmatprep.subr.mxu0 0.0
    %1133 = vmatpush2.msra.mxu0 0.0
    %1134 = vmatprep.subr.mxu0 0.0
    %1135 = vmatpush2.msra.mxu0 0.0
    %1136 = vmatprep.subr.mxu0 0.0
    %1137 = vmatpush2.msra.mxu0 0.0
    %1138 = vmatprep.subr.mxu0 0.0
    %1139 = vmatpush2.msra.mxu0 0.0
    %1140 = vmatprep.subr.mxu0 0.0
    %1141 = vmatpush2.msra.mxu0 0.0
    %1142 = vmatprep.subr.mxu0 0.0
    %1143 = vmatpush2.msra.mxu0 0.0
    %1144 = vmatprep.subr.mxu0 0.0
    %1145 = vmatpush2.msra.mxu0 0.0
    %1146 = vmatprep.mubr.f32.mxu0 0.0
    %1147 = vmatmul.mubr.f32.gmra.mxu0 %v1077
    %v1148 = vpop.f32.mrf.mxu0
    %v1149 = vadd.f32 0.0, %v1148
    %v1150 = vpop.f32.mrf.mxu0
    %1151 = vmatprep.mubr.f32.mxu0 0.0
    %1152 = vmatmul.mubr.f32.gmra.mxu0 %v1080
    %v1153 = vpop.f32.mrf.mxu0
    %v1154 = vadd.f32 0.0, %v1153
    %v1155 = vpop.f32.mrf.mxu0
    %1156 = vdwg.mxu0
    %v1157 = vadd.f32 %v1070, %v1149
    %v1158 = vadd.f32 %v1071, %v1154
    %1159 = vst.msk [vmem:[#allocation10] sm:$0xff] %vm78, %v1157
    %1160 = vst.msk [vmem:[#allocation10 + $0x8] sm:$0xff] %vm78, %v1158
    // Predicated region
    $region38: #{sublayer_connection.1} parent=1 // pred_check
      _
    $region39: #{sublayer_connection.1} parent=1 // pred_check_branch
      %1162 = sbr.rel (0) target = $region41
    $region40: #{sublayer_connection.1} parent=1 // pred_region
      %s1164 = ssub.s32 256, 256
      %1165 = vsyncadd [#allocation4], %s1164
      %s1166 = sshll.u32 [#allocation10], 4
      %s1167 = int_to_ptr.vmem [resolvable:$true] %s1166
      %1172 = dma.vmem_to_hbm [thread:$0]  %s1167, 256, %s5, [#allocation4], 128, 128, 8
    $region41: #{sublayer_connection.1} parent=1 // pred_fallthru
      _
    // Predicated region
    $region42: #{sublayer_connection.1} parent=1 // pred_check
      _
    $region43: #{sublayer_connection.1} parent=1 // pred_check_branch
      %1174 = sbr.rel (0) target = $region45
    $region44: #{sublayer_connection.1} parent=1 // pred_region
      %1175 = dma.done [#allocation4], 256
    $region45: #{sublayer_connection.1} parent=1 // pred_fallthru
      _
    %1176 = vsyncpa [#allocation3], 1
    %1177 = vsyncpa [#allocation6], 1
    %1178 = vsyncpa [#allocation9], 1
    %1179 = vsyncpa [#allocation4], 1

</llo_original>
